<compile_context>
chip_gen: v6e
topology: v6e:2x2x1
jax: 0.10.0
libtpu: 0.0.40
codegen_flags: <defaults>
</compile_context>

<pallas_src>
import math
from functools import partial

import jax
import jax.numpy as jnp
import numpy as np
from jax.experimental import pallas as pl
from jax.experimental.pallas import tpu as pltpu


def _round_up(x, m):
    return ((x + m - 1) // m) * m


_VMEM_LIMIT = 32 * 1024 * 1024  # fits v5e/v6e/v7x scoped VMEM comfortably


# ---------------------------------------------------------------------------
# Kernel 1: tiled scatter_mean over entities (one-hot @ neigh on the MXU)
#           fused with L2-normalize + residual add in the finalize branch.
#   grid = (n_entity_tiles, n_edge_tiles); acc is a VMEM f32 scratch.
#   neigh_aug carries a "ones" column so counts come out of the same matmul.
# ---------------------------------------------------------------------------
def _scatter_kernel(head_ref, neigh_ref, res_in_ref, emb_ref, res_out_ref,
                    acc_ref, *, ent_tile, cpad, ones_col):
    ek = pl.program_id(1)

    @pl.when(ek == 0)
    def _():
        acc_ref[...] = jnp.zeros_like(acc_ref)

    heads = head_ref[...]                                        # (1, edge_tile) int32
    ent_start = pl.program_id(0) * ent_tile
    rows = jax.lax.broadcasted_iota(
        jnp.int32, (ent_tile, heads.shape[1]), 0) + ent_start
    onehot = (rows == heads).astype(jnp.bfloat16)                # exact in bf16
    acc_ref[...] += jnp.dot(onehot, neigh_ref[...],
                            preferred_element_type=jnp.float32)  # sums + counts

    @pl.when(ek == pl.num_programs(1) - 1)
    def _():
        acc = acc_ref[...]
        counts = acc[:, ones_col:ones_col + 1]                   # [ent_tile, 1]
        mean = acc[:, :cpad] / jnp.maximum(counts, 1.0)          # scatter_mean
        if ones_col < cpad:                                      # zero the count lane
            lane = jax.lax.broadcasted_iota(jnp.int32, (ent_tile, cpad), 1)
            mean = jnp.where(lane == ones_col, 0.0, mean)
        nrm = jnp.sqrt(jnp.sum(mean * mean, axis=1, keepdims=True))
        xn = mean / jnp.maximum(nrm, 1e-12)                      # F.normalize
        emb_ref[...] = xn
        res_out_ref[...] = res_in_ref[...] + xn                  # residual add


def entity_scatter_mean_norm_add(head2d, neigh_aug, res_in, *,
                                 cpad, ones_col, ent_tile, edge_tile):
    n_entities_p = res_in.shape[0]
    n_edges_p, nw = neigh_aug.shape
    grid = (n_entities_p // ent_tile, n_edges_p // edge_tile)
    kernel = partial(_scatter_kernel, ent_tile=ent_tile, cpad=cpad,
                     ones_col=ones_col)
    out_shape = (jax.ShapeDtypeStruct((n_entities_p, cpad), jnp.float32),
                 jax.ShapeDtypeStruct((n_entities_p, cpad), jnp.float32))
    return pl.pallas_call(
        kernel,
        out_shape=out_shape,
        grid_spec=pltpu.PrefetchScalarGridSpec(
            num_scalar_prefetch=0,
            grid=grid,
            in_specs=[
                pl.BlockSpec((1, edge_tile), lambda i, k: (0, k)),
                pl.BlockSpec((edge_tile, nw), lambda i, k: (k, 0)),
                pl.BlockSpec((ent_tile, cpad), lambda i, k: (i, 0)),
            ],
            out_specs=[
                pl.BlockSpec((ent_tile, cpad), lambda i, k: (i, 0)),
                pl.BlockSpec((ent_tile, cpad), lambda i, k: (i, 0)),
            ],
            scratch_shapes=[pltpu.VMEM((ent_tile, nw), jnp.float32)],
        ),
        compiler_params=pltpu.CompilerParams(
            dimension_semantics=("parallel", "arbitrary"),
            vmem_limit_bytes=_VMEM_LIMIT,
        ),
    )(head2d, neigh_aug, res_in)


# ---------------------------------------------------------------------------
# Kernel 2: aspect aggregation for users / items, tiled over rows.
#   torch: agg = sparse.mm(mat, aspect); out = agg*softmax(..).sum(1) + agg
#   softmax row-sums are exactly 1  =>  out = 2*agg  (attention matmul elided)
#   fused with L2-normalize + residual add.
# ---------------------------------------------------------------------------
def _aspect_kernel(mat_ref, aspect_ref, res_in_ref, res_out_ref):
    agg = jnp.dot(mat_ref[...], aspect_ref[...],
                  preferred_element_type=jnp.float32)
    agg = agg + agg                               # == agg * softmax_sum + agg
    nrm = jnp.sqrt(jnp.sum(agg * agg, axis=1, keepdims=True))
    xn = agg / jnp.maximum(nrm, 1e-12)            # F.normalize
    res_out_ref[...] = res_in_ref[...] + xn       # residual add


def aspect_aggregate_norm_add(mat, aspect, res_in, *, row_tile):
    n_rows_p, n_aspects = mat.shape
    cpad = aspect.shape[1]
    grid = (n_rows_p // row_tile,)
    return pl.pallas_call(
        _aspect_kernel,
        out_shape=jax.ShapeDtypeStruct((n_rows_p, cpad), jnp.float32),
        grid_spec=pltpu.PrefetchScalarGridSpec(
            num_scalar_prefetch=0,
            grid=grid,
            in_specs=[
                pl.BlockSpec((row_tile, n_aspects), lambda i: (i, 0)),
                pl.BlockSpec((n_aspects, cpad), lambda i: (0, 0)),
                pl.BlockSpec((row_tile, cpad), lambda i: (i, 0)),
            ],
            out_specs=pl.BlockSpec((row_tile, cpad), lambda i: (i, 0)),
        ),
        compiler_params=pltpu.CompilerParams(
            dimension_semantics=("parallel",),
            vmem_limit_bytes=_VMEM_LIMIT,
        ),
    )(mat, aspect, res_in)


# ---------------------------------------------------------------------------
# GraphConv forward (mess_dropout=False, node_dropout=False path)
# ---------------------------------------------------------------------------
# TODO(synk): stochastic nn.Dropout (mess_dropout) / node dropout omitted;
#             would need pltpu.prng_* for training-mode parity.
def graph_conv_forward(user_emb, item_emb, entity_emb, aspect_emb,
                       edge_index, edge_type, ua_mat, ia_mat,
                       weight, W1, W2, n_items, n_hops,
                       ent_tile=256, edge_tile=512, row_tile=512):
    n_users, channel = user_emb.shape
    n_items_ = item_emb.shape[0]
    n_entities = entity_emb.shape[0]
    n_aspects = aspect_emb.shape[0]
    n_edges = edge_index.shape[1]

    # ---- lane-dense layout: pad channel once to a multiple of 128 ----------
    cpad = _round_up(channel, 128)
    if channel < cpad:
        ones_col, nw = channel, cpad          # count column fits in the padding
    else:
        ones_col, nw = cpad, cpad + 128       # need one extra 128-lane block

    # adaptive, (8,128)-aligned tile sizes (shrink for toy problems)
    ent_tile = min(ent_tile, _round_up(n_entities, 8))
    edge_tile = min(edge_tile, _round_up(n_edges, 128))
    row_tile_u = min(row_tile, _round_up(n_users, 8))
    row_tile_i = min(row_tile, _round_up(n_items_, 8))

    n_entities_p = _round_up(n_entities, ent_tile)
    n_edges_p = _round_up(n_edges, edge_tile)
    n_users_p = _round_up(n_users, row_tile_u)
    n_items_p = _round_up(n_items_, row_tile_i)

    def pad2(x, rows, cols):
        return jnp.pad(x, ((0, rows - x.shape[0]), (0, cols - x.shape[1])))

    entity_cur = pad2(entity_emb, n_entities_p, cpad)
    entity_res = entity_cur
    user_res = pad2(user_emb, n_users_p, cpad)
    item_res = pad2(item_emb, n_items_p, cpad)
    aspect_p = pad2(aspect_emb, n_aspects, cpad)
    ua_p = jnp.pad(ua_mat, ((0, n_users_p - n_users), (0, 0)))
    ia_p = jnp.pad(ia_mat, ((0, n_items_p - n_items_), (0, 0)))
    weight_p = jnp.pad(weight, ((0, 0), (0, cpad - channel)))

    head = edge_index[0].astype(jnp.int32)
    tail = edge_index[1].astype(jnp.int32)
    rel = (edge_type - 2).astype(jnp.int32)
    # padded edges get head = -1 -> match no entity row -> contribute nothing
    head2d = jnp.pad(head, (0, n_edges_p - n_edges),
                     constant_values=-1).reshape(1, n_edges_p)

    for _ in range(n_hops):
        # --- glue: gather + relation multiply (single fused XLA pass) -------
        # TODO(synk): fuse this gather into the scatter kernel via scalar-
        # prefetched tail ids + memory_space=pl.ANY manual DMA row-gather to
        # remove the [n_edges, C] HBM round trip per hop.
        neigh = entity_cur[tail] * weight_p[rel]                 # [n_edges, cpad]
        neigh = jnp.pad(neigh, ((0, n_edges_p - n_edges), (0, nw - cpad)))
        neigh = neigh.at[:, ones_col].set(1.0)                   # count column
        neigh = neigh.astype(jnp.bfloat16)                       # bf16 MXU path

        entity_cur, entity_res = entity_scatter_mean_norm_add(
            head2d, neigh, entity_res,
            cpad=cpad, ones_col=ones_col,
            ent_tile=ent_tile, edge_tile=edge_tile)

        user_res = aspect_aggregate_norm_add(ua_p, aspect_p, user_res,
                                             row_tile=row_tile_u)
        item_res = aspect_aggregate_norm_add(ia_p, aspect_p, item_res,
                                             row_tile=row_tile_i)

    item_out = (W1 * entity_res[:n_items, :channel]
                + W2 * item_res[:n_items_, :channel])
    user_out = user_res[:n_users, :channel]
    return item_out, user_out


# ---------------------------------------------------------------------------
# Pure-JAX f32 reference (mirrors the PyTorch semantics, incl. full softmax).
# ---------------------------------------------------------------------------
def ref_forward(user_emb, item_emb, entity_emb, aspect_emb,
                edge_index, edge_type, ua_mat, ia_mat,
                weight, W1, W2, n_items, n_hops):
    n_entities = entity_emb.shape[0]
    head = edge_index[0]
    tail = edge_index[1]
    n_edges = head.shape[0]

    def l2norm(x):
        n = jnp.sqrt(jnp.sum(x * x, axis=1, keepdims=True))
        return x / jnp.maximum(n, 1e-12)

    entity_res, user_res, item_res = entity_emb, user_emb, item_emb
    for _ in range(n_hops):
        neigh = entity_emb[tail] * weight[edge_type - 2]
        sums = jax.ops.segment_sum(neigh, head, num_segments=n_entities)
        counts = jax.ops.segment_sum(jnp.ones((n_edges,), jnp.float32), head,
                                     num_segments=n_entities)
        entity_agg = sums / jnp.maximum(counts, 1.0)[:, None]

        score_ua = jax.nn.softmax(user_emb @ aspect_emb.T, axis=1)
        score_ia = jax.nn.softmax(item_emb @ aspect_emb.T, axis=1)
        user_agg = ua_mat @ aspect_emb
        user_agg = user_agg * jnp.sum(score_ua, axis=1, keepdims=True) + user_agg
        item_agg = ia_mat @ aspect_emb
        item_agg = item_agg * jnp.sum(score_ia, axis=1, keepdims=True) + item_agg

        item_emb = l2norm(item_agg)
        user_emb = l2norm(user_agg)
        entity_emb = l2norm(entity_agg)
        item_res = item_res + item_emb
        user_res = user_res + user_emb
        entity_res = entity_res + entity_emb

    item_res = W1 * entity_res[:n_items] + W2 * item_res
    return item_res, user_res


if __name__ == "__main__":
    channel = 64
    n_users = 12
    n_items = 10
    n_entities = 24
    n_aspects = 6
    n_relations = 5          # weight has n_relations - 2 = 3 rows
    n_edges = 48
    n_hops = 2

    key = jax.random.PRNGKey(0)
    ks = jax.random.split(key, 11)

    user_emb = jax.random.normal(ks[0], (n_users, channel), jnp.float32)
    item_emb = jax.random.normal(ks[1], (n_items, channel), jnp.float32)
    entity_emb = jax.random.normal(ks[2], (n_entities, channel), jnp.float32)
    aspect_emb = jax.random.normal(ks[3], (n_aspects, channel), jnp.float32)

    head = jax.random.randint(ks[4], (n_edges,), 0, n_entities, jnp.int32)
    tail = jax.random.randint(ks[5], (n_edges,), 0, n_entities, jnp.int32)
    edge_index = jnp.stack([head, tail], axis=0)
    edge_type = jax.random.randint(ks[6], (n_edges,), 2, n_relations, jnp.int32)

    # dense stand-ins for the sparse user-aspect / item-aspect interaction mats
    ua_mat = (jax.random.uniform(ks[7], (n_users, n_aspects)) < 0.4).astype(jnp.float32)
    ia_mat = (jax.random.uniform(ks[8], (n_items, n_aspects)) < 0.4).astype(jnp.float32)

    # xavier_uniform_ init for relation weight, W1 = W2 = 1.0 (as in __init__)
    bound = math.sqrt(6.0 / ((n_relations - 2) + channel))
    weight = jax.random.uniform(ks[9], (n_relations - 2, channel),
                                minval=-bound, maxval=bound, dtype=jnp.float32)
    W1 = jnp.float32(1.0)
    W2 = jnp.float32(1.0)

    fwd = jax.jit(graph_conv_forward, static_argnames=("n_items", "n_hops"))
    item_out, user_out = fwd(user_emb, item_emb, entity_emb, aspect_emb,
                             edge_index, edge_type, ua_mat, ia_mat,
                             weight, W1, W2, n_items=n_items, n_hops=n_hops)
    item_out = jax.block_until_ready(item_out)
    user_out = jax.block_until_ready(user_out)

    item_ref, user_ref = ref_forward(
        user_emb, item_emb, entity_emb, aspect_emb, edge_index, edge_type,
        ua_mat, ia_mat, weight, W1, W2, n_items, n_hops)

    assert item_out.shape == (n_items, channel)
    assert user_out.shape == (n_users, channel)
    # bf16 MXU path for the scatter matmul (f32 accumulation) -> relaxed tol.
    np.testing.assert_allclose(np.asarray(item_out), np.asarray(item_ref),
                               rtol=2e-2, atol=2e-2)
    np.testing.assert_allclose(np.asarray(user_out), np.asarray(user_ref),
                               rtol=2e-2, atol=2e-2)
    print("KERNEL_OK")
</pallas_src>

<mosaic_0001>
module attributes {stable_mosaic.version = 11 : i64} {
  func.func @_scatter_kernel(%arg0: i32, %arg1: i32, %arg2: memref<1x128xi32, #tpu.memory_space<vmem>>, %arg3: memref<128x128xbf16, #tpu.memory_space<vmem>>, %arg4: memref<24x128xf32, #tpu.memory_space<vmem>>, %arg5: memref<24x128xf32, #tpu.memory_space<vmem>>, %arg6: memref<24x128xf32, #tpu.memory_space<vmem>>, %arg7: memref<24x128xf32, #tpu.memory_space<vmem>>) attributes {dimension_semantics = [#tpu.dimension_semantics<parallel>, #tpu.dimension_semantics<arbitrary>], iteration_bounds = array<i64: 1, 1>, scalar_prefetch = 0 : i64, scratch_operands = 1 : i64, tpu.core_type = #tpu.core_type<tc>, window_params = [{transform_indices = @transform_0, window_bounds = array<i64: 1, 128>}, {transform_indices = @transform_1, window_bounds = array<i64: 128, 128>}, {transform_indices = @transform_2, window_bounds = array<i64: 24, 128>}, {transform_indices = @transform_3, window_bounds = array<i64: 24, 128>}, {transform_indices = @transform_4, window_bounds = array<i64: 24, 128>}]} {
    %c0_i32 = arith.constant 0 : i32
    %0 = arith.cmpi eq, %arg1, %c0_i32 : i32
    %1 = arith.extui %0 : i1 to i32
    %c0_i32_0 = arith.constant 0 : i32
    %2 = arith.cmpi ne, %1, %c0_i32_0 : i32
    scf.if %2 {
      %cst_10 = arith.constant 0.000000e+00 : f32
      %21 = vector.broadcast %cst_10 : f32 to vector<24x128xf32>
      %c0_11 = arith.constant 0 : index
      %c0_12 = arith.constant 0 : index
      %22 = vector.load %arg7[%c0_11, %c0_12] : memref<24x128xf32, #tpu.memory_space<vmem>>, vector<24x128xf32>
      tpu.vector_store %arg7[%c0_11, %c0_12], %21 {strides = array<i32>} : memref<24x128xf32, #tpu.memory_space<vmem>>, vector<24x128xf32>,
    } else {
    }
    %c0 = arith.constant 0 : index
    %c0_1 = arith.constant 0 : index
    %3 = vector.load %arg2[%c0, %c0_1] : memref<1x128xi32, #tpu.memory_space<vmem>>, vector<1x128xi32>
    %c24_i32 = arith.constant 24 : i32
    %4 = arith.muli %arg0, %c24_i32 : i32
    %5 = tpu.iota {dimensions = array<i32: 0>} : vector<24x128xi32>
    %6 = vector.broadcast %4 : i32 to vector<24x128xi32>
    %7 = arith.addi %5, %6 : vector<24x128xi32>
    %8 = vector.broadcast %3 : vector<1x128xi32> to vector<24x128xi32>
    %9 = arith.cmpi eq, %7, %8 : vector<24x128xi32>
    %10 = arith.extui %9 : vector<24x128xi1> to vector<24x128xi32>
    %11 = arith.sitofp %10 : vector<24x128xi32> to vector<24x128xf32>
    %12 = arith.truncf %11 : vector<24x128xf32> to vector<24x128xbf16>
    %c0_2 = arith.constant 0 : index
    %c0_3 = arith.constant 0 : index
    %13 = vector.load %arg7[%c0_2, %c0_3] : memref<24x128xf32, #tpu.memory_space<vmem>>, vector<24x128xf32>
    %c0_4 = arith.constant 0 : index
    %c0_5 = arith.constant 0 : index
    %14 = vector.load %arg3[%c0_4, %c0_5] : memref<128x128xbf16, #tpu.memory_space<vmem>>, vector<128x128xbf16>
    %cst = arith.constant dense<0.000000e+00> : vector<24x128xf32>
    %15 = tpu.matmul %12, %14, %cst {dimension_numbers = #tpu.dot_dimension_numbers<[1], [0], [0], [1], [0, 0, 1, 1], [], []>} : vector<24x128xbf16>, vector<128x128xbf16>, vector<24x128xf32> -> vector<24x128xf32>
    %16 = arith.addf %13, %15 : vector<24x128xf32>
    %c0_6 = arith.constant 0 : index
    %c0_7 = arith.constant 0 : index
    %17 = vector.load %arg7[%c0_6, %c0_7] : memref<24x128xf32, #tpu.memory_space<vmem>>, vector<24x128xf32>
    tpu.vector_store %arg7[%c0_6, %c0_7], %16 {strides = array<i32>} : memref<24x128xf32, #tpu.memory_space<vmem>>, vector<24x128xf32>,
    %c0_i32_8 = arith.constant 0 : i32
    %18 = arith.cmpi eq, %arg1, %c0_i32_8 : i32
    %19 = arith.extui %18 : i1 to i32
    %c0_i32_9 = arith.constant 0 : i32
    %20 = arith.cmpi ne, %19, %c0_i32_9 : i32
    scf.if %20 {
      %c0_10 = arith.constant 0 : index
      %c0_11 = arith.constant 0 : index
      %21 = vector.load %arg7[%c0_10, %c0_11] : memref<24x128xf32, #tpu.memory_space<vmem>>, vector<24x128xf32>
      %22 = vector.extract_strided_slice %21 {offsets = [0, 64], sizes = [24, 1], strides = [1, 1]} : vector<24x128xf32> to vector<24x1xf32>
      %cst_12 = arith.constant 1.000000e+00 : f32
      %23 = vector.broadcast %cst_12 : f32 to vector<24x1xf32>
      %24 = arith.maximumf %22, %23 : vector<24x1xf32>
      %25 = vector.broadcast %24 : vector<24x1xf32> to vector<24x128xf32>
      %26 = arith.divf %21, %25 : vector<24x128xf32>
      %27 = tpu.iota {dimensions = array<i32: 1>} : vector<24x128xi32>
      %c64_i32 = arith.constant 64 : i32
      %28 = vector.broadcast %c64_i32 : i32 to vector<24x128xi32>
      %29 = arith.cmpi eq, %27, %28 : vector<24x128xi32>
      %cst_13 = arith.constant 0.000000e+00 : f32
      %30 = vector.broadcast %cst_13 : f32 to vector<24x128xf32>
      %31 = arith.select %29, %30, %26 : vector<24x128xi1>, vector<24x128xf32>
      %32 = arith.mulf %31, %31 : vector<24x128xf32>
      %cst_14 = arith.constant dense<0.000000e+00> : vector<24xf32>
      %33 = vector.multi_reduction <add>, %32, %cst_14 [1] : vector<24x128xf32> to vector<24xf32>
      %34 = vector.shape_cast %33 : vector<24xf32> to vector<24x1xf32>
      %35 = math.sqrt %34 : vector<24x1xf32>
      %cst_15 = arith.constant 9.99999996E-13 : f32
      %36 = vector.broadcast %cst_15 : f32 to vector<24x1xf32>
      %37 = arith.maximumf %35, %36 : vector<24x1xf32>
      %38 = vector.broadcast %37 : vector<24x1xf32> to vector<24x128xf32>
      %39 = arith.divf %31, %38 : vector<24x128xf32>
      %c0_16 = arith.constant 0 : index
      %c0_17 = arith.constant 0 : index
      %40 = vector.load %arg5[%c0_16, %c0_17] : memref<24x128xf32, #tpu.memory_space<vmem>>, vector<24x128xf32>
      tpu.vector_store %arg5[%c0_16, %c0_17], %39 {strides = array<i32>} : memref<24x128xf32, #tpu.memory_space<vmem>>, vector<24x128xf32>,
      %c0_18 = arith.constant 0 : index
      %c0_19 = arith.constant 0 : index
      %41 = vector.load %arg4[%c0_18, %c0_19] : memref<24x128xf32, #tpu.memory_space<vmem>>, vector<24x128xf32>
      %42 = arith.addf %41, %39 : vector<24x128xf32>
      %c0_20 = arith.constant 0 : index
      %c0_21 = arith.constant 0 : index
      %43 = vector.load %arg6[%c0_20, %c0_21] : memref<24x128xf32, #tpu.memory_space<vmem>>, vector<24x128xf32>
      tpu.vector_store %arg6[%c0_20, %c0_21], %42 {strides = array<i32>} : memref<24x128xf32, #tpu.memory_space<vmem>>, vector<24x128xf32>,
    } else {
    }
    return
  }
  func.func @transform_0(%arg0: i32, %arg1: i32) -> (i32, i32) {
    %c0_i32 = arith.constant 0 : i32
    %c0_i32_0 = arith.constant 0 : i32
    return %c0_i32, %arg1 : i32, i32
  }
  func.func @transform_1(%arg0: i32, %arg1: i32) -> (i32, i32) {
    %c0_i32 = arith.constant 0 : i32
    %c0_i32_0 = arith.constant 0 : i32
    return %arg1, %c0_i32 : i32, i32
  }
  func.func @transform_2(%arg0: i32, %arg1: i32) -> (i32, i32) {
    %c0_i32 = arith.constant 0 : i32
    %c0_i32_0 = arith.constant 0 : i32
    return %arg0, %c0_i32 : i32, i32
  }
  func.func @transform_3(%arg0: i32, %arg1: i32) -> (i32, i32) {
    %c0_i32 = arith.constant 0 : i32
    %c0_i32_0 = arith.constant 0 : i32
    return %arg0, %c0_i32 : i32, i32
  }
  func.func @transform_4(%arg0: i32, %arg1: i32) -> (i32, i32) {
    %c0_i32 = arith.constant 0 : i32
    %c0_i32_0 = arith.constant 0 : i32
    return %arg0, %c0_i32 : i32, i32
  }
}

module attributes {stable_mosaic.version = 11 : i64} {
  func.func @_scatter_kernel(%arg0: i32, %arg1: i32, %arg2: memref<1x128xi32, #tpu.memory_space<vmem>>, %arg3: memref<128x128xbf16, #tpu.memory_space<vmem>>, %arg4: memref<24x128xf32, #tpu.memory_space<vmem>>, %arg5: memref<24x128xf32, #tpu.memory_space<vmem>>, %arg6: memref<24x128xf32, #tpu.memory_space<vmem>>, %arg7: memref<24x128xf32, #tpu.memory_space<vmem>>) attributes {dimension_semantics = [#tpu.dimension_semantics<parallel>, #tpu.dimension_semantics<arbitrary>], iteration_bounds = array<i64: 1, 1>, scalar_prefetch = 0 : i64, scratch_operands = 1 : i64, tpu.core_type = #tpu.core_type<tc>, window_params = [{transform_indices = @transform_0, window_bounds = array<i64: 1, 128>}, {transform_indices = @transform_1, window_bounds = array<i64: 128, 128>}, {transform_indices = @transform_2, window_bounds = array<i64: 24, 128>}, {transform_indices = @transform_3, window_bounds = array<i64: 24, 128>}, {transform_indices = @transform_4, window_bounds = array<i64: 24, 128>}]} {
    %c0_i32 = arith.constant 0 : i32
    %0 = arith.cmpi eq, %arg1, %c0_i32 : i32
    %1 = arith.extui %0 : i1 to i32
    %c0_i32_0 = arith.constant 0 : i32
    %2 = arith.cmpi ne, %1, %c0_i32_0 : i32
    scf.if %2 {
      %cst_10 = arith.constant 0.000000e+00 : f32
      %21 = vector.broadcast %cst_10 : f32 to vector<24x128xf32>
      %c0_11 = arith.constant 0 : index
      %c0_12 = arith.constant 0 : index
      %22 = vector.load %arg7[%c0_11, %c0_12] : memref<24x128xf32, #tpu.memory_space<vmem>>, vector<24x128xf32>
      tpu.vector_store %arg7[%c0_11, %c0_12], %21 {strides = array<i32>} : memref<24x128xf32, #tpu.memory_space<vmem>>, vector<24x128xf32>,
    } else {
    }
    %c0 = arith.constant 0 : index
    %c0_1 = arith.constant 0 : index
    %3 = vector.load %arg2[%c0, %c0_1] : memref<1x128xi32, #tpu.memory_space<vmem>>, vector<1x128xi32>
    %c24_i32 = arith.constant 24 : i32
    %4 = arith.muli %arg0, %c24_i32 : i32
    %5 = tpu.iota {dimensions = array<i32: 0>} : vector<24x128xi32>
    %6 = vector.broadcast %4 : i32 to vector<24x128xi32>
    %7 = arith.addi %5, %6 : vector<24x128xi32>
    %8 = vector.broadcast %3 : vector<1x128xi32> to vector<24x128xi32>
    %9 = arith.cmpi eq, %7, %8 : vector<24x128xi32>
    %10 = arith.extui %9 : vector<24x128xi1> to vector<24x128xi32>
    %11 = arith.sitofp %10 : vector<24x128xi32> to vector<24x128xf32>
    %12 = arith.truncf %11 : vector<24x128xf32> to vector<24x128xbf16>
    %c0_2 = arith.constant 0 : index
    %c0_3 = arith.constant 0 : index
    %13 = vector.load %arg7[%c0_2, %c0_3] : memref<24x128xf32, #tpu.memory_space<vmem>>, vector<24x128xf32>
    %c0_4 = arith.constant 0 : index
    %c0_5 = arith.constant 0 : index
    %14 = vector.load %arg3[%c0_4, %c0_5] : memref<128x128xbf16, #tpu.memory_space<vmem>>, vector<128x128xbf16>
    %cst = arith.constant dense<0.000000e+00> : vector<24x128xf32>
    %15 = tpu.matmul %12, %14, %cst {dimension_numbers = #tpu.dot_dimension_numbers<[1], [0], [0], [1], [0, 0, 1, 1], [], []>} : vector<24x128xbf16>, vector<128x128xbf16>, vector<24x128xf32> -> vector<24x128xf32>
    %16 = arith.addf %13, %15 : vector<24x128xf32>
    %c0_6 = arith.constant 0 : index
    %c0_7 = arith.constant 0 : index
    %17 = vector.load %arg7[%c0_6, %c0_7] : memref<24x128xf32, #tpu.memory_space<vmem>>, vector<24x128xf32>
    tpu.vector_store %arg7[%c0_6, %c0_7], %16 {strides = array<i32>} : memref<24x128xf32, #tpu.memory_space<vmem>>, vector<24x128xf32>,
    %c0_i32_8 = arith.constant 0 : i32
    %18 = arith.cmpi eq, %arg1, %c0_i32_8 : i32
    %19 = arith.extui %18 : i1 to i32
    %c0_i32_9 = arith.constant 0 : i32
    %20 = arith.cmpi ne, %19, %c0_i32_9 : i32
    scf.if %20 {
      %c0_10 = arith.constant 0 : index
      %c0_11 = arith.constant 0 : index
      %21 = vector.load %arg7[%c0_10, %c0_11] : memref<24x128xf32, #tpu.memory_space<vmem>>, vector<24x128xf32>
      %22 = vector.extract_strided_slice %21 {offsets = [0, 64], sizes = [24, 1], strides = [1, 1]} : vector<24x128xf32> to vector<24x1xf32>
      %cst_12 = arith.constant 1.000000e+00 : f32
      %23 = vector.broadcast %cst_12 : f32 to vector<24x1xf32>
      %24 = arith.maximumf %22, %23 : vector<24x1xf32>
      %25 = vector.broadcast %24 : vector<24x1xf32> to vector<24x128xf32>
      %26 = arith.divf %21, %25 : vector<24x128xf32>
      %27 = tpu.iota {dimensions = array<i32: 1>} : vector<24x128xi32>
      %c64_i32 = arith.constant 64 : i32
      %28 = vector.broadcast %c64_i32 : i32 to vector<24x128xi32>
      %29 = arith.cmpi eq, %27, %28 : vector<24x128xi32>
      %cst_13 = arith.constant 0.000000e+00 : f32
      %30 = vector.broadcast %cst_13 : f32 to vector<24x128xf32>
      %31 = arith.select %29, %30, %26 : vector<24x128xi1>, vector<24x128xf32>
      %32 = arith.mulf %31, %31 : vector<24x128xf32>
      %cst_14 = arith.constant dense<0.000000e+00> : vector<24xf32>
      %33 = vector.multi_reduction <add>, %32, %cst_14 [1] : vector<24x128xf32> to vector<24xf32>
      %34 = vector.shape_cast %33 : vector<24xf32> to vector<24x1xf32>
      %35 = math.sqrt %34 : vector<24x1xf32>
      %cst_15 = arith.constant 9.99999996E-13 : f32
      %36 = vector.broadcast %cst_15 : f32 to vector<24x1xf32>
      %37 = arith.maximumf %35, %36 : vector<24x1xf32>
      %38 = vector.broadcast %37 : vector<24x1xf32> to vector<24x128xf32>
      %39 = arith.divf %31, %38 : vector<24x128xf32>
      %c0_16 = arith.constant 0 : index
      %c0_17 = arith.constant 0 : index
      %40 = vector.load %arg5[%c0_16, %c0_17] : memref<24x128xf32, #tpu.memory_space<vmem>>, vector<24x128xf32>
      tpu.vector_store %arg5[%c0_16, %c0_17], %39 {strides = array<i32>} : memref<24x128xf32, #tpu.memory_space<vmem>>, vector<24x128xf32>,
      %c0_18 = arith.constant 0 : index
      %c0_19 = arith.constant 0 : index
      %41 = vector.load %arg4[%c0_18, %c0_19] : memref<24x128xf32, #tpu.memory_space<vmem>>, vector<24x128xf32>
      %42 = arith.addf %41, %39 : vector<24x128xf32>
      %c0_20 = arith.constant 0 : index
      %c0_21 = arith.constant 0 : index
      %43 = vector.load %arg6[%c0_20, %c0_21] : memref<24x128xf32, #tpu.memory_space<vmem>>, vector<24x128xf32>
      tpu.vector_store %arg6[%c0_20, %c0_21], %42 {strides = array<i32>} : memref<24x128xf32, #tpu.memory_space<vmem>>, vector<24x128xf32>,
    } else {
    }
    return
  }
  func.func @transform_0(%arg0: i32, %arg1: i32) -> (i32, i32) {
    %c0_i32 = arith.constant 0 : i32
    %c0_i32_0 = arith.constant 0 : i32
    return %c0_i32, %arg1 : i32, i32
  }
  func.func @transform_1(%arg0: i32, %arg1: i32) -> (i32, i32) {
    %c0_i32 = arith.constant 0 : i32
    %c0_i32_0 = arith.constant 0 : i32
    return %arg1, %c0_i32 : i32, i32
  }
  func.func @transform_2(%arg0: i32, %arg1: i32) -> (i32, i32) {
    %c0_i32 = arith.constant 0 : i32
    %c0_i32_0 = arith.constant 0 : i32
    return %arg0, %c0_i32 : i32, i32
  }
  func.func @transform_3(%arg0: i32, %arg1: i32) -> (i32, i32) {
    %c0_i32 = arith.constant 0 : i32
    %c0_i32_0 = arith.constant 0 : i32
    return %arg0, %c0_i32 : i32, i32
  }
  func.func @transform_4(%arg0: i32, %arg1: i32) -> (i32, i32) {
    %c0_i32 = arith.constant 0 : i32
    %c0_i32_0 = arith.constant 0 : i32
    return %arg0, %c0_i32 : i32, i32
  }
}

module attributes {stable_mosaic.version = 11 : i64} {
  func.func @_aspect_kernel(%arg0: i32, %arg1: memref<16x6xf32, #tpu.memory_space<vmem>>, %arg2: memref<6x128xf32, #tpu.memory_space<vmem>>, %arg3: memref<16x128xf32, #tpu.memory_space<vmem>>, %arg4: memref<16x128xf32, #tpu.memory_space<vmem>>) attributes {dimension_semantics = [#tpu.dimension_semantics<parallel>], iteration_bounds = array<i64: 1>, scalar_prefetch = 0 : i64, scratch_operands = 0 : i64, tpu.core_type = #tpu.core_type<tc>, window_params = [{transform_indices = @transform_0, window_bounds = array<i64: 16, 6>}, {pipeline_mode = #tpu.pipeline_mode<synchronous>, transform_indices = @transform_1, window_bounds = array<i64: 6, 128>}, {transform_indices = @transform_2, window_bounds = array<i64: 16, 128>}, {transform_indices = @transform_3, window_bounds = array<i64: 16, 128>}]} {
    %c0 = arith.constant 0 : index
    %c0_0 = arith.constant 0 : index
    %0 = vector.load %arg1[%c0, %c0_0] : memref<16x6xf32, #tpu.memory_space<vmem>>, vector<16x6xf32>
    %c0_1 = arith.constant 0 : index
    %c0_2 = arith.constant 0 : index
    %1 = vector.load %arg2[%c0_1, %c0_2] : memref<6x128xf32, #tpu.memory_space<vmem>>, vector<6x128xf32>
    %cst = arith.constant dense<0.000000e+00> : vector<16x128xf32>
    %2 = tpu.matmul %0, %1, %cst {dimension_numbers = #tpu.dot_dimension_numbers<[1], [0], [0], [1], [0, 0, 1, 1], [], []>} : vector<16x6xf32>, vector<6x128xf32>, vector<16x128xf32> -> vector<16x128xf32>
    %3 = arith.addf %2, %2 : vector<16x128xf32>
    %4 = arith.mulf %3, %3 : vector<16x128xf32>
    %cst_3 = arith.constant dense<0.000000e+00> : vector<16xf32>
    %5 = vector.multi_reduction <add>, %4, %cst_3 [1] : vector<16x128xf32> to vector<16xf32>
    %6 = vector.shape_cast %5 : vector<16xf32> to vector<16x1xf32>
    %7 = math.sqrt %6 : vector<16x1xf32>
    %cst_4 = arith.constant 9.99999996E-13 : f32
    %8 = vector.broadcast %cst_4 : f32 to vector<16x1xf32>
    %9 = arith.maximumf %7, %8 : vector<16x1xf32>
    %10 = vector.broadcast %9 : vector<16x1xf32> to vector<16x128xf32>
    %11 = arith.divf %3, %10 : vector<16x128xf32>
    %c0_5 = arith.constant 0 : index
    %c0_6 = arith.constant 0 : index
    %12 = vector.load %arg3[%c0_5, %c0_6] : memref<16x128xf32, #tpu.memory_space<vmem>>, vector<16x128xf32>
    %13 = arith.addf %12, %11 : vector<16x128xf32>
    %c0_7 = arith.constant 0 : index
    %c0_8 = arith.constant 0 : index
    %14 = vector.load %arg4[%c0_7, %c0_8] : memref<16x128xf32, #tpu.memory_space<vmem>>, vector<16x128xf32>
    tpu.vector_store %arg4[%c0_7, %c0_8], %13 {strides = array<i32>} : memref<16x128xf32, #tpu.memory_space<vmem>>, vector<16x128xf32>,
    return
  }
  func.func @transform_0(%arg0: i32) -> (i32, i32) {
    %c0_i32 = arith.constant 0 : i32
    %c0_i32_0 = arith.constant 0 : i32
    return %arg0, %c0_i32 : i32, i32
  }
  func.func @transform_1(%arg0: i32) -> (i32, i32) {
    %c0_i32 = arith.constant 0 : i32
    %c0_i32_0 = arith.constant 0 : i32
    %c0_i32_1 = arith.constant 0 : i32
    return %c0_i32, %c0_i32_0 : i32, i32
  }
  func.func @transform_2(%arg0: i32) -> (i32, i32) {
    %c0_i32 = arith.constant 0 : i32
    %c0_i32_0 = arith.constant 0 : i32
    return %arg0, %c0_i32 : i32, i32
  }
  func.func @transform_3(%arg0: i32) -> (i32, i32) {
    %c0_i32 = arith.constant 0 : i32
    %c0_i32_0 = arith.constant 0 : i32
    return %arg0, %c0_i32 : i32, i32
  }
}

module attributes {stable_mosaic.version = 11 : i64} {
  func.func @_aspect_kernel(%arg0: i32, %arg1: memref<16x6xf32, #tpu.memory_space<vmem>>, %arg2: memref<6x128xf32, #tpu.memory_space<vmem>>, %arg3: memref<16x128xf32, #tpu.memory_space<vmem>>, %arg4: memref<16x128xf32, #tpu.memory_space<vmem>>) attributes {dimension_semantics = [#tpu.dimension_semantics<parallel>], iteration_bounds = array<i64: 1>, scalar_prefetch = 0 : i64, scratch_operands = 0 : i64, tpu.core_type = #tpu.core_type<tc>, window_params = [{transform_indices = @transform_0, window_bounds = array<i64: 16, 6>}, {pipeline_mode = #tpu.pipeline_mode<synchronous>, transform_indices = @transform_1, window_bounds = array<i64: 6, 128>}, {transform_indices = @transform_2, window_bounds = array<i64: 16, 128>}, {transform_indices = @transform_3, window_bounds = array<i64: 16, 128>}]} {
    %c0 = arith.constant 0 : index
    %c0_0 = arith.constant 0 : index
    %0 = vector.load %arg1[%c0, %c0_0] : memref<16x6xf32, #tpu.memory_space<vmem>>, vector<16x6xf32>
    %c0_1 = arith.constant 0 : index
    %c0_2 = arith.constant 0 : index
    %1 = vector.load %arg2[%c0_1, %c0_2] : memref<6x128xf32, #tpu.memory_space<vmem>>, vector<6x128xf32>
    %cst = arith.constant dense<0.000000e+00> : vector<16x128xf32>
    %2 = tpu.matmul %0, %1, %cst {dimension_numbers = #tpu.dot_dimension_numbers<[1], [0], [0], [1], [0, 0, 1, 1], [], []>} : vector<16x6xf32>, vector<6x128xf32>, vector<16x128xf32> -> vector<16x128xf32>
    %3 = arith.addf %2, %2 : vector<16x128xf32>
    %4 = arith.mulf %3, %3 : vector<16x128xf32>
    %cst_3 = arith.constant dense<0.000000e+00> : vector<16xf32>
    %5 = vector.multi_reduction <add>, %4, %cst_3 [1] : vector<16x128xf32> to vector<16xf32>
    %6 = vector.shape_cast %5 : vector<16xf32> to vector<16x1xf32>
    %7 = math.sqrt %6 : vector<16x1xf32>
    %cst_4 = arith.constant 9.99999996E-13 : f32
    %8 = vector.broadcast %cst_4 : f32 to vector<16x1xf32>
    %9 = arith.maximumf %7, %8 : vector<16x1xf32>
    %10 = vector.broadcast %9 : vector<16x1xf32> to vector<16x128xf32>
    %11 = arith.divf %3, %10 : vector<16x128xf32>
    %c0_5 = arith.constant 0 : index
    %c0_6 = arith.constant 0 : index
    %12 = vector.load %arg3[%c0_5, %c0_6] : memref<16x128xf32, #tpu.memory_space<vmem>>, vector<16x128xf32>
    %13 = arith.addf %12, %11 : vector<16x128xf32>
    %c0_7 = arith.constant 0 : index
    %c0_8 = arith.constant 0 : index
    %14 = vector.load %arg4[%c0_7, %c0_8] : memref<16x128xf32, #tpu.memory_space<vmem>>, vector<16x128xf32>
    tpu.vector_store %arg4[%c0_7, %c0_8], %13 {strides = array<i32>} : memref<16x128xf32, #tpu.memory_space<vmem>>, vector<16x128xf32>,
    return
  }
  func.func @transform_0(%arg0: i32) -> (i32, i32) {
    %c0_i32 = arith.constant 0 : i32
    %c0_i32_0 = arith.constant 0 : i32
    return %arg0, %c0_i32 : i32, i32
  }
  func.func @transform_1(%arg0: i32) -> (i32, i32) {
    %c0_i32 = arith.constant 0 : i32
    %c0_i32_0 = arith.constant 0 : i32
    %c0_i32_1 = arith.constant 0 : i32
    return %c0_i32, %c0_i32_0 : i32, i32
  }
  func.func @transform_2(%arg0: i32) -> (i32, i32) {
    %c0_i32 = arith.constant 0 : i32
    %c0_i32_0 = arith.constant 0 : i32
    return %arg0, %c0_i32 : i32, i32
  }
  func.func @transform_3(%arg0: i32) -> (i32, i32) {
    %c0_i32 = arith.constant 0 : i32
    %c0_i32_0 = arith.constant 0 : i32
    return %arg0, %c0_i32 : i32, i32
  }
}

</mosaic_0001>

<llo_original>
// kernel: graph_conv_forward.6
$region0: #{graph_conv_forward.6}
  #allocation0 [shape = 'u32[]', space=smem, size = 0x4, offset = 0x4, fixed_abs, tag = 'smem constant byte address 0x4 - core index']
  #allocation1 [shape = 'u32[144,128]{1,0:T(1,128)}', space=vmem, size = 0x12000, scoped, tag = 'internal scratch']
  #allocation2 [shape = 'f32[24,128]{1,0:T(8,128)}', space=vmem, size = 0x3000, scoped, tag = 'scratch operand']
  %s0 = inlined_call_operand.vmem [shape: s32[1,128], index: 0, kind: input, shape index: {}]
  %s1 = inlined_call_operand.vmem [shape: bf16[128,128], index: 1, kind: input, shape index: {}]
  %s2 = inlined_call_operand.vmem [shape: f32[24,128], index: 2, kind: input, shape index: {}]
  %s3 = inlined_call_operand.vmem [shape: f32[24,128], index: 3, kind: output, shape index: {0}]
  %s4 = inlined_call_operand.vmem [shape: f32[24,128], index: 4, kind: output, shape index: {1}]
  %5 = xla_tuple %s3, %s4
  %s6 = sld [smem:[#allocation0]]
  $region38: #{graph_conv_forward.6} parent=0
    _
  %s8 = ssub.s32 1, %s6
  %s9 = scalar_select 0, %s8, %s6
  // Predicated region
  $region2: #{graph_conv_forward.6} parent=0 // pred_check
    _
  $region3: #{graph_conv_forward.6} parent=0 // pred_check_branch
    %11 = sbr.rel (0) target = $region5
  $region4: #{graph_conv_forward.6} parent=0 // pred_region
    _
  $region5: #{graph_conv_forward.6} parent=0 // pred_fallthru
    _
  // Predicated region
  $region6: #{graph_conv_forward.6} parent=0 // pred_check
    _
  $region7: #{graph_conv_forward.6} parent=0 // pred_check_branch
    %13 = sbr.rel (0) target = $region9
  $region8: #{graph_conv_forward.6} parent=0 // pred_region
    _
  $region9: #{graph_conv_forward.6} parent=0 // pred_fallthru
    _
  // Predicated region
  $region10: #{graph_conv_forward.6} parent=0 // pred_check
    _
  $region11: #{graph_conv_forward.6} parent=0 // pred_check_branch
    %15 = sbr.rel (0) target = $region13
  $region12: #{graph_conv_forward.6} parent=0 // pred_region
    _
  $region13: #{graph_conv_forward.6} parent=0 // pred_fallthru
    _
  %p17 = scmp.eq.s32.totalorder 0, 0
  // Predicated region
  $region14: #{graph_conv_forward.6} parent=0 // pred_check
    %p18 = pneg %p17
  $region15: #{graph_conv_forward.6} parent=0 // pred_check_branch
    %20 = sbr.rel (%p18) target = $region17
  $region16: #{graph_conv_forward.6} parent=0 // pred_region
    %21 = vst [vmem:[#allocation2] sm:$0xff] 0.0
    %22 = vst [vmem:[#allocation2 + $0x8] sm:$0xff] 0.0
    %23 = vst [vmem:[#allocation2 + $0x10] sm:$0xff] 0.0
  $region17: #{graph_conv_forward.6} parent=0 // pred_fallthru
    _
  %v24 = vld [vmem:[%s0] sm:$0x1]
  %s25 = smul.u32 0, 24
  %v26 = vlaneseq
  %v27 = vshrl.u32 %v26, 7
  %v28 = vadd.s32 %v27, 8
  %v29 = vadd.s32 %v27, 16
  %v30 = vstv %s25
  %v31 = vadd.s32 %v27, %v30
  %v32 = vadd.s32 %v28, %v30
  %v33 = vadd.s32 %v29, %v30
  %v34 = vlaneseq
  %v35 = vshrl.u32 %v34, 7
  %v36 = vsub.s32 0, %v35
  %v37 = vrot.slane %v24, %v36
  %vm38 = vcmp.eq.s32.totalorder %v31, %v37
  %vm39 = vcmp.eq.s32.totalorder %v32, %v37
  %vm40 = vcmp.eq.s32.totalorder %v33, %v37
  %v41 = vsel %vm38, 1, 0
  %v42 = vsel %vm39, 1, 0
  %v43 = vsel %vm40, 1, 0
  %v44 = vcvt.s32.f32 %v41
  %v45 = vcvt.s32.f32 %v42
  %v46 = vcvt.s32.f32 %v43
  %v47 = vpack.c.bf16 %v45, %v44
  %v48 = vpack.c.bf16 %v46, %v46
  %v49 = vld [vmem:[#allocation2] sm:$0xff]
  %v50 = vld [vmem:[#allocation2 + $0x8] sm:$0xff]
  %v51 = vld [vmem:[#allocation2 + $0x10] sm:$0xff]
  %v52 = vld [vmem:[%s1] sm:$0xf]
  %v53 = vld [vmem:[%s1 + $0x4] sm:$0xf]
  %v54 = vld [vmem:[%s1 + $0x8] sm:$0xf]
  %v55 = vld [vmem:[%s1 + $0xc] sm:$0xf]
  %v56 = vld [vmem:[%s1 + $0x10] sm:$0xf]
  %v57 = vld [vmem:[%s1 + $0x14] sm:$0xf]
  %v58 = vld [vmem:[%s1 + $0x18] sm:$0xf]
  %v59 = vld [vmem:[%s1 + $0x1c] sm:$0xf]
  %v60 = vld [vmem:[%s1 + $0x20] sm:$0xf]
  %v61 = vld [vmem:[%s1 + $0x24] sm:$0xf]
  %v62 = vld [vmem:[%s1 + $0x28] sm:$0xf]
  %v63 = vld [vmem:[%s1 + $0x2c] sm:$0xf]
  %v64 = vld [vmem:[%s1 + $0x30] sm:$0xf]
  %v65 = vld [vmem:[%s1 + $0x34] sm:$0xf]
  %v66 = vld [vmem:[%s1 + $0x38] sm:$0xf]
  %v67 = vld [vmem:[%s1 + $0x3c] sm:$0xf]
  %v84 = vunpack.c.l.b16 %v52
  %v85 = vunpack.c.l.b16 %v53
  %v86 = vunpack.c.l.b16 %v54
  %v87 = vunpack.c.l.b16 %v55
  %v88 = vunpack.c.l.b16 %v56
  %v89 = vunpack.c.l.b16 %v57
  %v90 = vunpack.c.l.b16 %v58
  %v91 = vunpack.c.l.b16 %v59
  %v92 = vunpack.c.l.b16 %v60
  %v93 = vunpack.c.l.b16 %v61
  %v94 = vunpack.c.l.b16 %v62
  %v95 = vunpack.c.l.b16 %v63
  %v96 = vunpack.c.l.b16 %v64
  %v97 = vunpack.c.l.b16 %v65
  %v98 = vunpack.c.l.b16 %v66
  %v99 = vunpack.c.l.b16 %v67
  %v100 = vpack.c.b16 %v85, %v84
  %v101 = vpack.c.b16 %v87, %v86
  %v102 = vpack.c.b16 %v89, %v88
  %v103 = vpack.c.b16 %v91, %v90
  %v104 = vpack.c.b16 %v93, %v92
  %v105 = vpack.c.b16 %v95, %v94
  %v106 = vpack.c.b16 %v97, %v96
  %v107 = vpack.c.b16 %v99, %v98
  %116 = vmatprep.subr.bf16.mxu0 0
  %117 = vmatpush1.bf16.msra.mxu0 %v107
  %118 = vmatprep.subr.bf16.mxu0 0
  %119 = vmatpush1.bf16.msra.mxu0 %v106
  %120 = vmatprep.subr.bf16.mxu0 0
  %121 = vmatpush1.bf16.msra.mxu0 %v105
  %122 = vmatprep.subr.bf16.mxu0 0
  %123 = vmatpush1.bf16.msra.mxu0 %v104
  %124 = vmatprep.subr.bf16.mxu0 0
  %125 = vmatpush1.bf16.msra.mxu0 %v103
  %126 = vmatprep.subr.bf16.mxu0 0
  %127 = vmatpush1.bf16.msra.mxu0 %v102
  %128 = vmatprep.subr.bf16.mxu0 0
  %129 = vmatpush1.bf16.msra.mxu0 %v101
  %130 = vmatprep.subr.bf16.mxu0 0
  %131 = vmatpush1.bf16.msra.mxu0 %v100
  %132 = vmatprep.subr.bf16.mxu0 0
  %133 = vmatpush2.bf16.msra.mxu0 0
  %134 = vmatprep.subr.bf16.mxu0 0
  %135 = vmatpush2.bf16.msra.mxu0 0
  %136 = vmatprep.subr.bf16.mxu0 0
  %137 = vmatpush2.bf16.msra.mxu0 0
  %138 = vmatprep.subr.bf16.mxu0 0
  %139 = vmatpush2.bf16.msra.mxu0 0
  %140 = vmatprep.subr.bf16.mxu0 0
  %141 = vmatpush2.bf16.msra.mxu0 0
  %142 = vmatprep.subr.bf16.mxu0 0
  %143 = vmatpush2.bf16.msra.mxu0 0
  %144 = vmatprep.subr.bf16.mxu0 0
  %145 = vmatpush2.bf16.msra.mxu0 0
  %146 = vmatprep.subr.bf16.mxu0 0
  %147 = vmatpush2.bf16.msra.mxu0 0
  %148 = vmatprep.mubr.bf16.mxu0 0
  %149 = vmatmul.mubr.bf16.gmra.mxu0 %v47
  %v150 = vpop.f32.mrf.mxu0
  %v151 = vadd.f32 0.0, %v150
  %v152 = vpop.f32.mrf.mxu0
  %v153 = vpop.f32.mrf.mxu0
  %v154 = vadd.f32 0.0, %v153
  %v155 = vpop.f32.mrf.mxu0
  %156 = vmatprep.mubr.bf16.mxu0 0
  %157 = vmatmul.mubr.bf16.gmra.mxu0 %v48
  %v158 = vpop.f32.mrf.mxu0
  %v159 = vadd.f32 0.0, %v158
  %v160 = vpop.f32.mrf.mxu0
  %v161 = vpop.f32.mrf.mxu0
  %v162 = vpop.f32.mrf.mxu0
  %163 = vdwg.mxu0
  %v164 = vadd.f32 %v49, %v151
  %v165 = vadd.f32 %v50, %v154
  %v166 = vadd.f32 %v51, %v159
  %167 = vst [vmem:[#allocation2] sm:$0xff] %v164
  %168 = vst [vmem:[#allocation2 + $0x8] sm:$0xff] %v165
  %169 = vst [vmem:[#allocation2 + $0x10] sm:$0xff] %v166
  // Predicated region
  $region18: #{graph_conv_forward.6} parent=0 // pred_check
    %p170 = pneg %p17
  $region19: #{graph_conv_forward.6} parent=0 // pred_check_branch
    %172 = sbr.rel (%p170) target = $region21
  $region20: #{graph_conv_forward.6} parent=0 // pred_region
    %v173 = vld [vmem:[#allocation2] sm:$0xff]
    %v174 = vld [vmem:[#allocation2 + $0x8] sm:$0xff]
    %v175 = vld [vmem:[#allocation2 + $0x10] sm:$0xff]
    %v176 = vmax.f32 %v173, 1.0
    %v177 = vmax.f32 %v174, 1.0
    %v178 = vmax.f32 %v175, 1.0
    %180 = vset.pattern.permute.xlu0 64
    %181 = vperm.xlu0 %180, %v176
    %v182 = vpop.permute.xlu0 %181
    %185 = vset.pattern.permute.xlu0 64
    %186 = vperm.xlu0 %185, %v177
    %v187 = vpop.permute.xlu0 %186
    %190 = vset.pattern.permute.xlu0 64
    %191 = vperm.xlu0 %190, %v178
    %v192 = vpop.permute.xlu0 %191
    %v194 = vrcp.pop %v182
    %v195 = vmul.f32 %v173, %v194
    %v196 = vrcp.pop %v187
    %v197 = vmul.f32 %v174, %v196
    %v198 = vrcp.pop %v192
    %v199 = vmul.f32 %v175, %v198
    %v200 = vlaneseq
    %v201 = vand.u32 %v200, 127
    %vm202 = vcmp.eq.s32.totalorder %v201, 64
    %v203 = vsel %vm202, 0.0, %v195
    %v204 = vsel %vm202, 0.0, %v197
    %v205 = vsel %vm202, 0.0, %v199
    %v206 = vmul.f32 %v203, %v203
    %v207 = vmul.f32 %v204, %v204
    %v208 = vmul.f32 %v205, %v205
    %209 = vadd.xlane.f32.xlu0 %v206
    %v210 = vpop.xlane.xlu0 %209
    %211 = vadd.xlane.f32.xlu0 %v207
    %v212 = vpop.xlane.xlu0 %211
    %213 = vadd.xlane.f32.xlu0 %v208
    %v214 = vpop.xlane.xlu0 %213
    %v215 = vrsqrt.pop %v210
    %v216 = vmul.f32 %v210, %v215
    %vm217 = vcmp.eq.f32.partialorder %v210, inf
    %v218 = vsel %vm217, %v210, %v216
    %vm219 = vcmp.eq.f32.partialorder %v210, 0.0
    %v220 = vand.u32 %v210, 2147483648
    %v221 = vsel %vm219, %v220, %v218
    %v222 = vrsqrt.pop %v212
    %v223 = vmul.f32 %v212, %v222
    %vm224 = vcmp.eq.f32.partialorder %v212, inf
    %v225 = vsel %vm224, %v212, %v223
    %vm226 = vcmp.eq.f32.partialorder %v212, 0.0
    %v227 = vand.u32 %v212, 2147483648
    %v228 = vsel %vm226, %v227, %v225
    %v229 = vrsqrt.pop %v214
    %v230 = vmul.f32 %v214, %v229
    %vm231 = vcmp.eq.f32.partialorder %v214, inf
    %v232 = vsel %vm231, %v214, %v230
    %vm233 = vcmp.eq.f32.partialorder %v214, 0.0
    %v234 = vand.u32 %v214, 2147483648
    %v235 = vsel %vm233, %v234, %v232
    %v236 = vmax.f32 %v221, 1e-12
    %v237 = vmax.f32 %v228, 1e-12
    %v238 = vmax.f32 %v235, 1e-12
    %v239 = vrcp.pop %v236
    %v240 = vmul.f32 %v203, %v239
    %v241 = vrcp.pop %v237
    %v242 = vmul.f32 %v204, %v241
    %v243 = vrcp.pop %v238
    %v244 = vmul.f32 %v205, %v243
    %245 = vst [vmem:[%s3] sm:$0xff] %v240
    %246 = vst [vmem:[%s3 + $0x8] sm:$0xff] %v242
    %247 = vst [vmem:[%s3 + $0x10] sm:$0xff] %v244
    %v248 = vld [vmem:[%s2] sm:$0xff]
    %v249 = vld [vmem:[%s2 + $0x8] sm:$0xff]
    %v250 = vld [vmem:[%s2 + $0x10] sm:$0xff]
    %v251 = vadd.f32 %v248, %v240
    %v252 = vadd.f32 %v249, %v242
    %v253 = vadd.f32 %v250, %v244
    %254 = vst [vmem:[%s4] sm:$0xff] %v251
    %255 = vst [vmem:[%s4 + $0x8] sm:$0xff] %v252
    %256 = vst [vmem:[%s4 + $0x10] sm:$0xff] %v253
  $region21: #{graph_conv_forward.6} parent=0 // pred_fallthru
    _
  // Predicated region
  $region22: #{graph_conv_forward.6} parent=0 // pred_check
    _
  $region23: #{graph_conv_forward.6} parent=0 // pred_check_branch
    %258 = sbr.rel (0) target = $region25
  $region24: #{graph_conv_forward.6} parent=0 // pred_region
    _
  $region25: #{graph_conv_forward.6} parent=0 // pred_fallthru
    _
  // Predicated region
  $region26: #{graph_conv_forward.6} parent=0 // pred_check
    _
  $region27: #{graph_conv_forward.6} parent=0 // pred_check_branch
    %260 = sbr.rel (0) target = $region29
  $region28: #{graph_conv_forward.6} parent=0 // pred_region
    _
  $region29: #{graph_conv_forward.6} parent=0 // pred_fallthru
    _
  // Predicated region
  $region30: #{graph_conv_forward.6} parent=0 // pred_check
    _
  $region31: #{graph_conv_forward.6} parent=0 // pred_check_branch
    %262 = sbr.rel (0) target = $region33
  $region32: #{graph_conv_forward.6} parent=0 // pred_region
    _
  $region33: #{graph_conv_forward.6} parent=0 // pred_fallthru
    _
  // Predicated region
  $region34: #{graph_conv_forward.6} parent=0 // pred_check
    _
  $region35: #{graph_conv_forward.6} parent=0 // pred_check_branch
    %264 = sbr.rel (0) target = $region37
  $region36: #{graph_conv_forward.6} parent=0 // pred_region
    _
  $region37: #{graph_conv_forward.6} parent=0 // pred_fallthru
    _

// kernel: graph_conv_forward.9
$region0: #{graph_conv_forward.9}
  #allocation0 [shape = 'u32[]', space=smem, size = 0x4, offset = 0x4, fixed_abs, tag = 'smem constant byte address 0x4 - core index']
  #allocation1 [shape = 'u32[144,128]{1,0:T(1,128)}', space=vmem, size = 0x12000, scoped, tag = 'internal scratch']
  #allocation2 [shape = 'f32[24,128]{1,0:T(8,128)}', space=vmem, size = 0x3000, scoped, tag = 'scratch operand']
  %s0 = inlined_call_operand.vmem [shape: s32[1,128], index: 0, kind: input, shape index: {}]
  %s1 = inlined_call_operand.vmem [shape: bf16[128,128], index: 1, kind: input, shape index: {}]
  %s2 = inlined_call_operand.vmem [shape: f32[24,128], index: 2, kind: input, shape index: {}]
  %s3 = inlined_call_operand.hbm [shape: f32[24,128], index: 3, kind: output, shape index: {0}]
  %s4 = inlined_call_operand.vmem [shape: f32[24,128], index: 4, kind: output, shape index: {1}]
  %5 = xla_tuple %s3, %s4
  %s6 = sld [smem:[#allocation0]]
  $region38: #{graph_conv_forward.9} parent=0
    _
  %s8 = ssub.s32 1, %s6
  %s9 = scalar_select 0, %s8, %s6
  $region1: #{graph_conv_forward.9} parent=0
    #allocation3 [shape = 'u8[12288]{0}', space=vmem, size = 0x3000, scoped, tag = 'output window, operand 0, single buffered']
    #allocation4 [shape = 's32[1]{0}', space=sflag, size = 0x4, scoped, tag = 'scoped memory for graph_conv_forward.9']
    %10 = vsyncpa [#allocation4], 0
    // Predicated region
    $region2: #{graph_conv_forward.9} parent=1 // pred_check
      _
    $region3: #{graph_conv_forward.9} parent=1 // pred_check_branch
      %12 = sbr.rel (0) target = $region5
    $region4: #{graph_conv_forward.9} parent=1 // pred_region
      _
    $region5: #{graph_conv_forward.9} parent=1 // pred_fallthru
      _
    // Predicated region
    $region6: #{graph_conv_forward.9} parent=1 // pred_check
      _
    $region7: #{graph_conv_forward.9} parent=1 // pred_check_branch
      %14 = sbr.rel (0) target = $region9
    $region8: #{graph_conv_forward.9} parent=1 // pred_region
      _
    $region9: #{graph_conv_forward.9} parent=1 // pred_fallthru
      _
    // Predicated region
    $region10: #{graph_conv_forward.9} parent=1 // pred_check
      _
    $region11: #{graph_conv_forward.9} parent=1 // pred_check_branch
      %16 = sbr.rel (0) target = $region13
    $region12: #{graph_conv_forward.9} parent=1 // pred_region
      _
    $region13: #{graph_conv_forward.9} parent=1 // pred_fallthru
      _
    %p18 = scmp.eq.s32.totalorder 0, 0
    // Predicated region
    $region14: #{graph_conv_forward.9} parent=1 // pred_check
      %p19 = pneg %p18
    $region15: #{graph_conv_forward.9} parent=1 // pred_check_branch
      %21 = sbr.rel (%p19) target = $region17
    $region16: #{graph_conv_forward.9} parent=1 // pred_region
      %22 = vst [vmem:[#allocation2] sm:$0xff] 0.0
      %23 = vst [vmem:[#allocation2 + $0x8] sm:$0xff] 0.0
      %24 = vst [vmem:[#allocation2 + $0x10] sm:$0xff] 0.0
    $region17: #{graph_conv_forward.9} parent=1 // pred_fallthru
      _
    %v25 = vld [vmem:[%s0] sm:$0x1]
    %s26 = smul.u32 0, 24
    %v27 = vlaneseq
    %v28 = vshrl.u32 %v27, 7
    %v29 = vadd.s32 %v28, 8
    %v30 = vadd.s32 %v28, 16
    %v31 = vstv %s26
    %v32 = vadd.s32 %v28, %v31
    %v33 = vadd.s32 %v29, %v31
    %v34 = vadd.s32 %v30, %v31
    %v35 = vlaneseq
    %v36 = vshrl.u32 %v35, 7
    %v37 = vsub.s32 0, %v36
    %v38 = vrot.slane %v25, %v37
    %vm39 = vcmp.eq.s32.totalorder %v32, %v38
    %vm40 = vcmp.eq.s32.totalorder %v33, %v38
    %vm41 = vcmp.eq.s32.totalorder %v34, %v38
    %v42 = vsel %vm39, 1, 0
    %v43 = vsel %vm40, 1, 0
    %v44 = vsel %vm41, 1, 0
    %v45 = vcvt.s32.f32 %v42
    %v46 = vcvt.s32.f32 %v43
    %v47 = vcvt.s32.f32 %v44
    %v48 = vpack.c.bf16 %v46, %v45
    %v49 = vpack.c.bf16 %v47, %v47
    %v50 = vld [vmem:[#allocation2] sm:$0xff]
    %v51 = vld [vmem:[#allocation2 + $0x8] sm:$0xff]
    %v52 = vld [vmem:[#allocation2 + $0x10] sm:$0xff]
    %v53 = vld [vmem:[%s1] sm:$0xf]
    %v54 = vld [vmem:[%s1 + $0x4] sm:$0xf]
    %v55 = vld [vmem:[%s1 + $0x8] sm:$0xf]
    %v56 = vld [vmem:[%s1 + $0xc] sm:$0xf]
    %v57 = vld [vmem:[%s1 + $0x10] sm:$0xf]
    %v58 = vld [vmem:[%s1 + $0x14] sm:$0xf]
    %v59 = vld [vmem:[%s1 + $0x18] sm:$0xf]
    %v60 = vld [vmem:[%s1 + $0x1c] sm:$0xf]
    %v61 = vld [vmem:[%s1 + $0x20] sm:$0xf]
    %v62 = vld [vmem:[%s1 + $0x24] sm:$0xf]
    %v63 = vld [vmem:[%s1 + $0x28] sm:$0xf]
    %v64 = vld [vmem:[%s1 + $0x2c] sm:$0xf]
    %v65 = vld [vmem:[%s1 + $0x30] sm:$0xf]
    %v66 = vld [vmem:[%s1 + $0x34] sm:$0xf]
    %v67 = vld [vmem:[%s1 + $0x38] sm:$0xf]
    %v68 = vld [vmem:[%s1 + $0x3c] sm:$0xf]
    %v85 = vunpack.c.l.b16 %v53
    %v86 = vunpack.c.l.b16 %v54
    %v87 = vunpack.c.l.b16 %v55
    %v88 = vunpack.c.l.b16 %v56
    %v89 = vunpack.c.l.b16 %v57
    %v90 = vunpack.c.l.b16 %v58
    %v91 = vunpack.c.l.b16 %v59
    %v92 = vunpack.c.l.b16 %v60
    %v93 = vunpack.c.l.b16 %v61
    %v94 = vunpack.c.l.b16 %v62
    %v95 = vunpack.c.l.b16 %v63
    %v96 = vunpack.c.l.b16 %v64
    %v97 = vunpack.c.l.b16 %v65
    %v98 = vunpack.c.l.b16 %v66
    %v99 = vunpack.c.l.b16 %v67
    %v100 = vunpack.c.l.b16 %v68
    %v101 = vpack.c.b16 %v86, %v85
    %v102 = vpack.c.b16 %v88, %v87
    %v103 = vpack.c.b16 %v90, %v89
    %v104 = vpack.c.b16 %v92, %v91
    %v105 = vpack.c.b16 %v94, %v93
    %v106 = vpack.c.b16 %v96, %v95
    %v107 = vpack.c.b16 %v98, %v97
    %v108 = vpack.c.b16 %v100, %v99
    %117 = vmatprep.subr.bf16.mxu0 0
    %118 = vmatpush1.bf16.msra.mxu0 %v108
    %119 = vmatprep.subr.bf16.mxu0 0
    %120 = vmatpush1.bf16.msra.mxu0 %v107
    %121 = vmatprep.subr.bf16.mxu0 0
    %122 = vmatpush1.bf16.msra.mxu0 %v106
    %123 = vmatprep.subr.bf16.mxu0 0
    %124 = vmatpush1.bf16.msra.mxu0 %v105
    %125 = vmatprep.subr.bf16.mxu0 0
    %126 = vmatpush1.bf16.msra.mxu0 %v104
    %127 = vmatprep.subr.bf16.mxu0 0
    %128 = vmatpush1.bf16.msra.mxu0 %v103
    %129 = vmatprep.subr.bf16.mxu0 0
    %130 = vmatpush1.bf16.msra.mxu0 %v102
    %131 = vmatprep.subr.bf16.mxu0 0
    %132 = vmatpush1.bf16.msra.mxu0 %v101
    %133 = vmatprep.subr.bf16.mxu0 0
    %134 = vmatpush2.bf16.msra.mxu0 0
    %135 = vmatprep.subr.bf16.mxu0 0
    %136 = vmatpush2.bf16.msra.mxu0 0
    %137 = vmatprep.subr.bf16.mxu0 0
    %138 = vmatpush2.bf16.msra.mxu0 0
    %139 = vmatprep.subr.bf16.mxu0 0
    %140 = vmatpush2.bf16.msra.mxu0 0
    %141 = vmatprep.subr.bf16.mxu0 0
    %142 = vmatpush2.bf16.msra.mxu0 0
    %143 = vmatprep.subr.bf16.mxu0 0
    %144 = vmatpush2.bf16.msra.mxu0 0
    %145 = vmatprep.subr.bf16.mxu0 0
    %146 = vmatpush2.bf16.msra.mxu0 0
    %147 = vmatprep.subr.bf16.mxu0 0
    %148 = vmatpush2.bf16.msra.mxu0 0
    %149 = vmatprep.mubr.bf16.mxu0 0
    %150 = vmatmul.mubr.bf16.gmra.mxu0 %v48
    %v151 = vpop.f32.mrf.mxu0
    %v152 = vadd.f32 0.0, %v151
    %v153 = vpop.f32.mrf.mxu0
    %v154 = vpop.f32.mrf.mxu0
    %v155 = vadd.f32 0.0, %v154
    %v156 = vpop.f32.mrf.mxu0
    %157 = vmatprep.mubr.bf16.mxu0 0
    %158 = vmatmul.mubr.bf16.gmra.mxu0 %v49
    %v159 = vpop.f32.mrf.mxu0
    %v160 = vadd.f32 0.0, %v159
    %v161 = vpop.f32.mrf.mxu0
    %v162 = vpop.f32.mrf.mxu0
    %v163 = vpop.f32.mrf.mxu0
    %164 = vdwg.mxu0
    %v165 = vadd.f32 %v50, %v152
    %v166 = vadd.f32 %v51, %v155
    %v167 = vadd.f32 %v52, %v160
    %168 = vst [vmem:[#allocation2] sm:$0xff] %v165
    %169 = vst [vmem:[#allocation2 + $0x8] sm:$0xff] %v166
    %170 = vst [vmem:[#allocation2 + $0x10] sm:$0xff] %v167
    // Predicated region
    $region18: #{graph_conv_forward.9} parent=1 // pred_check
      %p171 = pneg %p18
    $region19: #{graph_conv_forward.9} parent=1 // pred_check_branch
      %173 = sbr.rel (%p171) target = $region21
    $region20: #{graph_conv_forward.9} parent=1 // pred_region
      %v174 = vld [vmem:[#allocation2] sm:$0xff]
      %v175 = vld [vmem:[#allocation2 + $0x8] sm:$0xff]
      %v176 = vld [vmem:[#allocation2 + $0x10] sm:$0xff]
      %v177 = vmax.f32 %v174, 1.0
      %v178 = vmax.f32 %v175, 1.0
      %v179 = vmax.f32 %v176, 1.0
      %181 = vset.pattern.permute.xlu0 64
      %182 = vperm.xlu0 %181, %v177
      %v183 = vpop.permute.xlu0 %182
      %186 = vset.pattern.permute.xlu0 64
      %187 = vperm.xlu0 %186, %v178
      %v188 = vpop.permute.xlu0 %187
      %191 = vset.pattern.permute.xlu0 64
      %192 = vperm.xlu0 %191, %v179
      %v193 = vpop.permute.xlu0 %192
      %v195 = vrcp.pop %v183
      %v196 = vmul.f32 %v174, %v195
      %v197 = vrcp.pop %v188
      %v198 = vmul.f32 %v175, %v197
      %v199 = vrcp.pop %v193
      %v200 = vmul.f32 %v176, %v199
      %v201 = vlaneseq
      %v202 = vand.u32 %v201, 127
      %vm203 = vcmp.eq.s32.totalorder %v202, 64
      %v204 = vsel %vm203, 0.0, %v196
      %v205 = vsel %vm203, 0.0, %v198
      %v206 = vsel %vm203, 0.0, %v200
      %v207 = vmul.f32 %v204, %v204
      %v208 = vmul.f32 %v205, %v205
      %v209 = vmul.f32 %v206, %v206
      %210 = vadd.xlane.f32.xlu0 %v207
      %v211 = vpop.xlane.xlu0 %210
      %212 = vadd.xlane.f32.xlu0 %v208
      %v213 = vpop.xlane.xlu0 %212
      %214 = vadd.xlane.f32.xlu0 %v209
      %v215 = vpop.xlane.xlu0 %214
      %v216 = vrsqrt.pop %v211
      %v217 = vmul.f32 %v211, %v216
      %vm218 = vcmp.eq.f32.partialorder %v211, inf
      %v219 = vsel %vm218, %v211, %v217
      %vm220 = vcmp.eq.f32.partialorder %v211, 0.0
      %v221 = vand.u32 %v211, 2147483648
      %v222 = vsel %vm220, %v221, %v219
      %v223 = vrsqrt.pop %v213
      %v224 = vmul.f32 %v213, %v223
      %vm225 = vcmp.eq.f32.partialorder %v213, inf
      %v226 = vsel %vm225, %v213, %v224
      %vm227 = vcmp.eq.f32.partialorder %v213, 0.0
      %v228 = vand.u32 %v213, 2147483648
      %v229 = vsel %vm227, %v228, %v226
      %v230 = vrsqrt.pop %v215
      %v231 = vmul.f32 %v215, %v230
      %vm232 = vcmp.eq.f32.partialorder %v215, inf
      %v233 = vsel %vm232, %v215, %v231
      %vm234 = vcmp.eq.f32.partialorder %v215, 0.0
      %v235 = vand.u32 %v215, 2147483648
      %v236 = vsel %vm234, %v235, %v233
      %v237 = vmax.f32 %v222, 1e-12
      %v238 = vmax.f32 %v229, 1e-12
      %v239 = vmax.f32 %v236, 1e-12
      %v240 = vrcp.pop %v237
      %v241 = vmul.f32 %v204, %v240
      %v242 = vrcp.pop %v238
      %v243 = vmul.f32 %v205, %v242
      %v244 = vrcp.pop %v239
      %v245 = vmul.f32 %v206, %v244
      %246 = vst [vmem:[#allocation3] sm:$0xff] %v241
      %247 = vst [vmem:[#allocation3 + $0x8] sm:$0xff] %v243
      %248 = vst [vmem:[#allocation3 + $0x10] sm:$0xff] %v245
      %v249 = vld [vmem:[%s2] sm:$0xff]
      %v250 = vld [vmem:[%s2 + $0x8] sm:$0xff]
      %v251 = vld [vmem:[%s2 + $0x10] sm:$0xff]
      %v252 = vadd.f32 %v249, %v241
      %v253 = vadd.f32 %v250, %v243
      %v254 = vadd.f32 %v251, %v245
      %255 = vst [vmem:[%s4] sm:$0xff] %v252
      %256 = vst [vmem:[%s4 + $0x8] sm:$0xff] %v253
      %257 = vst [vmem:[%s4 + $0x10] sm:$0xff] %v254
    $region21: #{graph_conv_forward.9} parent=1 // pred_fallthru
      _
    // Predicated region
    $region22: #{graph_conv_forward.9} parent=1 // pred_check
      _
    $region23: #{graph_conv_forward.9} parent=1 // pred_check_branch
      %259 = sbr.rel (0) target = $region25
    $region24: #{graph_conv_forward.9} parent=1 // pred_region
      %s261 = ssub.s32 384, 384
      %262 = vsyncadd [#allocation4], %s261
      %s263 = sshll.u32 [#allocation3], 4
      %s264 = int_to_ptr.vmem [resolvable:$true] %s263
      %269 = dma.vmem_to_hbm [thread:$0]  %s264, 384, %s3, [#allocation4], 128, 128, 8
    $region25: #{graph_conv_forward.9} parent=1 // pred_fallthru
      _
    // Predicated region
    $region26: #{graph_conv_forward.9} parent=1 // pred_check
      _
    $region27: #{graph_conv_forward.9} parent=1 // pred_check_branch
      %271 = sbr.rel (0) target = $region29
    $region28: #{graph_conv_forward.9} parent=1 // pred_region
      _
    $region29: #{graph_conv_forward.9} parent=1 // pred_fallthru
      _
    // Predicated region
    $region30: #{graph_conv_forward.9} parent=1 // pred_check
      _
    $region31: #{graph_conv_forward.9} parent=1 // pred_check_branch
      %273 = sbr.rel (0) target = $region33
    $region32: #{graph_conv_forward.9} parent=1 // pred_region
      %274 = dma.done [#allocation4], 384
    $region33: #{graph_conv_forward.9} parent=1 // pred_fallthru
      _
    // Predicated region
    $region34: #{graph_conv_forward.9} parent=1 // pred_check
      _
    $region35: #{graph_conv_forward.9} parent=1 // pred_check_branch
      %276 = sbr.rel (0) target = $region37
    $region36: #{graph_conv_forward.9} parent=1 // pred_region
      _
    $region37: #{graph_conv_forward.9} parent=1 // pred_fallthru
      _
    %277 = vsyncpa [#allocation4], 1

// kernel: graph_conv_forward.8
$region0: #{graph_conv_forward.8}
  #allocation0 [shape = 'u32[]', space=smem, size = 0x4, offset = 0x4, fixed_abs, tag = 'smem constant byte address 0x4 - core index']
  #allocation1 [shape = 'u32[144,128]{1,0:T(1,128)}', space=vmem, size = 0x12000, scoped, tag = 'internal scratch']
  %s0 = inlined_call_operand.vmem [shape: f32[16,6], index: 0, kind: input, shape index: {}]
  %s1 = inlined_call_operand.vmem [shape: f32[6,128], index: 1, kind: input, shape index: {}]
  %s2 = inlined_call_operand.vmem [shape: f32[16,128], index: 2, kind: input, shape index: {}]
  %s3 = inlined_call_operand.vmem [shape: f32[16,128], index: 3, kind: output, shape index: {}]
  %s4 = sld [smem:[#allocation0]]
  $region22: #{graph_conv_forward.8} parent=0
    _
  %s6 = ssub.s32 1, %s4
  %s7 = scalar_select 0, %s6, %s4
  // Predicated region
  $region2: #{graph_conv_forward.8} parent=0 // pred_check
    _
  $region3: #{graph_conv_forward.8} parent=0 // pred_check_branch
    %9 = sbr.rel (0) target = $region5
  $region4: #{graph_conv_forward.8} parent=0 // pred_region
    _
  $region5: #{graph_conv_forward.8} parent=0 // pred_fallthru
    _
  // Predicated region
  $region6: #{graph_conv_forward.8} parent=0 // pred_check
    _
  $region7: #{graph_conv_forward.8} parent=0 // pred_check_branch
    %11 = sbr.rel (0) target = $region9
  $region8: #{graph_conv_forward.8} parent=0 // pred_region
    _
  $region9: #{graph_conv_forward.8} parent=0 // pred_fallthru
    _
  // Predicated region
  $region10: #{graph_conv_forward.8} parent=0 // pred_check
    _
  $region11: #{graph_conv_forward.8} parent=0 // pred_check_branch
    %13 = sbr.rel (0) target = $region13
  $region12: #{graph_conv_forward.8} parent=0 // pred_region
    _
  $region13: #{graph_conv_forward.8} parent=0 // pred_fallthru
    _
  %v14 = vld [vmem:[%s0] sm:$0xff]
  %v15 = vld [vmem:[%s0 + $0x8] sm:$0xff]
  %v16 = vld [vmem:[%s1] sm:$0x3f]
  %vm17 = vcmask 48128
  %v19 = vsel %vm17, %v14, 0
  %v22 = vsel %vm17, %v15, 0
  %vm24 = vcmask 1045504
  %v26 = vsel %vm24, %v16, 0
  %28 = vmatprep.subr.mxu0 0.0
  %29 = vmatpush1.msra.mxu0 0.0
  %30 = vmatprep.subr.mxu0 0.0
  %31 = vmatpush1.msra.mxu0 0.0
  %32 = vmatprep.subr.mxu0 0.0
  %33 = vmatpush1.msra.mxu0 0.0
  %34 = vmatprep.subr.mxu0 0.0
  %35 = vmatpush1.msra.mxu0 0.0
  %36 = vmatprep.subr.mxu0 0.0
  %37 = vmatpush1.msra.mxu0 0.0
  %38 = vmatprep.subr.mxu0 0.0
  %39 = vmatpush1.msra.mxu0 0.0
  %40 = vmatprep.subr.mxu0 0.0
  %41 = vmatpush1.msra.mxu0 0.0
  %42 = vmatprep.subr.mxu0 0.0
  %43 = vmatpush1.msra.mxu0 0.0
  %44 = vmatprep.subr.mxu0 0.0
  %45 = vmatpush1.msra.mxu0 0.0
  %46 = vmatprep.subr.mxu0 0.0
  %47 = vmatpush1.msra.mxu0 0.0
  %48 = vmatprep.subr.mxu0 0.0
  %49 = vmatpush1.msra.mxu0 0.0
  %50 = vmatprep.subr.mxu0 0.0
  %51 = vmatpush1.msra.mxu0 0.0
  %52 = vmatprep.subr.mxu0 0.0
  %53 = vmatpush1.msra.mxu0 0.0
  %54 = vmatprep.subr.mxu0 0.0
  %55 = vmatpush1.msra.mxu0 0.0
  %56 = vmatprep.subr.mxu0 0.0
  %57 = vmatpush1.msra.mxu0 0.0
  %58 = vmatprep.subr.mxu0 0.0
  %59 = vmatpush1.msra.mxu0 %v26
  %60 = vmatprep.subr.mxu0 0.0
  %61 = vmatpush2.msra.mxu0 0.0
  %62 = vmatprep.subr.mxu0 0.0
  %63 = vmatpush2.msra.mxu0 0.0
  %64 = vmatprep.subr.mxu0 0.0
  %65 = vmatpush2.msra.mxu0 0.0
  %66 = vmatprep.subr.mxu0 0.0
  %67 = vmatpush2.msra.mxu0 0.0
  %68 = vmatprep.subr.mxu0 0.0
  %69 = vmatpush2.msra.mxu0 0.0
  %70 = vmatprep.subr.mxu0 0.0
  %71 = vmatpush2.msra.mxu0 0.0
  %72 = vmatprep.subr.mxu0 0.0
  %73 = vmatpush2.msra.mxu0 0.0
  %74 = vmatprep.subr.mxu0 0.0
  %75 = vmatpush2.msra.mxu0 0.0
  %76 = vmatprep.subr.mxu0 0.0
  %77 = vmatpush2.msra.mxu0 0.0
  %78 = vmatprep.subr.mxu0 0.0
  %79 = vmatpush2.msra.mxu0 0.0
  %80 = vmatprep.subr.mxu0 0.0
  %81 = vmatpush2.msra.mxu0 0.0
  %82 = vmatprep.subr.mxu0 0.0
  %83 = vmatpush2.msra.mxu0 0.0
  %84 = vmatprep.subr.mxu0 0.0
  %85 = vmatpush2.msra.mxu0 0.0
  %86 = vmatprep.subr.mxu0 0.0
  %87 = vmatpush2.msra.mxu0 0.0
  %88 = vmatprep.subr.mxu0 0.0
  %89 = vmatpush2.msra.mxu0 0.0
  %90 = vmatprep.subr.mxu0 0.0
  %91 = vmatpush2.msra.mxu0 0.0
  %92 = vmatprep.mubr.f32.mxu0 0.0
  %93 = vmatmul.mubr.f32.gmra.mxu0 %v19
  %v94 = vpop.f32.mrf.mxu0
  %v95 = vadd.f32 0.0, %v94
  %v96 = vpop.f32.mrf.mxu0
  %97 = vmatprep.mubr.f32.mxu0 0.0
  %98 = vmatmul.mubr.f32.gmra.mxu0 %v22
  %v99 = vpop.f32.mrf.mxu0
  %v100 = vadd.f32 0.0, %v99
  %v101 = vpop.f32.mrf.mxu0
  %102 = vdwg.mxu0
  %v103 = vadd.f32 %v95, %v95
  %v104 = vadd.f32 %v100, %v100
  %v105 = vmul.f32 %v103, %v103
  %v106 = vmul.f32 %v104, %v104
  %107 = vadd.xlane.f32.xlu0 %v105
  %v108 = vpop.xlane.xlu0 %107
  %109 = vadd.xlane.f32.xlu0 %v106
  %v110 = vpop.xlane.xlu0 %109
  %v111 = vrsqrt.pop %v108
  %v112 = vmul.f32 %v108, %v111
  %vm113 = vcmp.eq.f32.partialorder %v108, inf
  %v114 = vsel %vm113, %v108, %v112
  %vm115 = vcmp.eq.f32.partialorder %v108, 0.0
  %v116 = vand.u32 %v108, 2147483648
  %v117 = vsel %vm115, %v116, %v114
  %v118 = vrsqrt.pop %v110
  %v119 = vmul.f32 %v110, %v118
  %vm120 = vcmp.eq.f32.partialorder %v110, inf
  %v121 = vsel %vm120, %v110, %v119
  %vm122 = vcmp.eq.f32.partialorder %v110, 0.0
  %v123 = vand.u32 %v110, 2147483648
  %v124 = vsel %vm122, %v123, %v121
  %v125 = vmax.f32 %v117, 1e-12
  %v126 = vmax.f32 %v124, 1e-12
  %v127 = vrcp.pop %v125
  %v128 = vmul.f32 %v103, %v127
  %v129 = vrcp.pop %v126
  %v130 = vmul.f32 %v104, %v129
  %v131 = vld [vmem:[%s2] sm:$0xff]
  %v132 = vld [vmem:[%s2 + $0x8] sm:$0xff]
  %v133 = vadd.f32 %v131, %v128
  %v134 = vadd.f32 %v132, %v130
  %135 = vst [vmem:[%s3] sm:$0xff] %v133
  %136 = vst [vmem:[%s3 + $0x8] sm:$0xff] %v134
  // Predicated region
  $region14: #{graph_conv_forward.8} parent=0 // pred_check
    _
  $region15: #{graph_conv_forward.8} parent=0 // pred_check_branch
    %138 = sbr.rel (0) target = $region17
  $region16: #{graph_conv_forward.8} parent=0 // pred_region
    _
  $region17: #{graph_conv_forward.8} parent=0 // pred_fallthru
    _
  // Predicated region
  $region18: #{graph_conv_forward.8} parent=0 // pred_check
    _
  $region19: #{graph_conv_forward.8} parent=0 // pred_check_branch
    %140 = sbr.rel (0) target = $region21
  $region20: #{graph_conv_forward.8} parent=0 // pred_region
    _
  $region21: #{graph_conv_forward.8} parent=0 // pred_fallthru
    _

// kernel: graph_conv_forward.10
$region0: #{graph_conv_forward.10}
  #allocation0 [shape = 'u32[]', space=smem, size = 0x4, offset = 0x4, fixed_abs, tag = 'smem constant byte address 0x4 - core index']
  #allocation1 [shape = 'u32[144,128]{1,0:T(1,128)}', space=vmem, size = 0x12000, scoped, tag = 'internal scratch']
  %s0 = inlined_call_operand.vmem [shape: f32[16,6], index: 0, kind: input, shape index: {}]
  %s1 = inlined_call_operand.vmem [shape: f32[6,128], index: 1, kind: input, shape index: {}]
  %s2 = inlined_call_operand.vmem [shape: f32[16,128], index: 2, kind: input, shape index: {}]
  %s3 = inlined_call_operand.hbm [shape: f32[16,128], index: 3, kind: output, shape index: {}]
  %s4 = sld [smem:[#allocation0]]
  $region22: #{graph_conv_forward.10} parent=0
    _
  %s6 = ssub.s32 1, %s4
  %s7 = scalar_select 0, %s6, %s4
  $region1: #{graph_conv_forward.10} parent=0
    #allocation2 [shape = 'u8[8192]{0}', space=vmem, size = 0x2000, scoped, tag = 'output window, operand 0, single buffered']
    #allocation3 [shape = 's32[1]{0}', space=sflag, size = 0x4, scoped, tag = 'scoped memory for graph_conv_forward.10']
    %8 = vsyncpa [#allocation3], 0
    // Predicated region
    $region2: #{graph_conv_forward.10} parent=1 // pred_check
      _
    $region3: #{graph_conv_forward.10} parent=1 // pred_check_branch
      %10 = sbr.rel (0) target = $region5
    $region4: #{graph_conv_forward.10} parent=1 // pred_region
      _
    $region5: #{graph_conv_forward.10} parent=1 // pred_fallthru
      _
    // Predicated region
    $region6: #{graph_conv_forward.10} parent=1 // pred_check
      _
    $region7: #{graph_conv_forward.10} parent=1 // pred_check_branch
      %12 = sbr.rel (0) target = $region9
    $region8: #{graph_conv_forward.10} parent=1 // pred_region
      _
    $region9: #{graph_conv_forward.10} parent=1 // pred_fallthru
      _
    // Predicated region
    $region10: #{graph_conv_forward.10} parent=1 // pred_check
      _
    $region11: #{graph_conv_forward.10} parent=1 // pred_check_branch
      %14 = sbr.rel (0) target = $region13
    $region12: #{graph_conv_forward.10} parent=1 // pred_region
      _
    $region13: #{graph_conv_forward.10} parent=1 // pred_fallthru
      _
    %v15 = vld [vmem:[%s0] sm:$0xff]
    %v16 = vld [vmem:[%s0 + $0x8] sm:$0xff]
    %v17 = vld [vmem:[%s1] sm:$0x3f]
    %vm18 = vcmask 48128
    %v20 = vsel %vm18, %v15, 0
    %v23 = vsel %vm18, %v16, 0
    %vm25 = vcmask 1045504
    %v27 = vsel %vm25, %v17, 0
    %29 = vmatprep.subr.mxu0 0.0
    %30 = vmatpush1.msra.mxu0 0.0
    %31 = vmatprep.subr.mxu0 0.0
    %32 = vmatpush1.msra.mxu0 0.0
    %33 = vmatprep.subr.mxu0 0.0
    %34 = vmatpush1.msra.mxu0 0.0
    %35 = vmatprep.subr.mxu0 0.0
    %36 = vmatpush1.msra.mxu0 0.0
    %37 = vmatprep.subr.mxu0 0.0
    %38 = vmatpush1.msra.mxu0 0.0
    %39 = vmatprep.subr.mxu0 0.0
    %40 = vmatpush1.msra.mxu0 0.0
    %41 = vmatprep.subr.mxu0 0.0
    %42 = vmatpush1.msra.mxu0 0.0
    %43 = vmatprep.subr.mxu0 0.0
    %44 = vmatpush1.msra.mxu0 0.0
    %45 = vmatprep.subr.mxu0 0.0
    %46 = vmatpush1.msra.mxu0 0.0
    %47 = vmatprep.subr.mxu0 0.0
    %48 = vmatpush1.msra.mxu0 0.0
    %49 = vmatprep.subr.mxu0 0.0
    %50 = vmatpush1.msra.mxu0 0.0
    %51 = vmatprep.subr.mxu0 0.0
    %52 = vmatpush1.msra.mxu0 0.0
    %53 = vmatprep.subr.mxu0 0.0
    %54 = vmatpush1.msra.mxu0 0.0
    %55 = vmatprep.subr.mxu0 0.0
    %56 = vmatpush1.msra.mxu0 0.0
    %57 = vmatprep.subr.mxu0 0.0
    %58 = vmatpush1.msra.mxu0 0.0
    %59 = vmatprep.subr.mxu0 0.0
    %60 = vmatpush1.msra.mxu0 %v27
    %61 = vmatprep.subr.mxu0 0.0
    %62 = vmatpush2.msra.mxu0 0.0
    %63 = vmatprep.subr.mxu0 0.0
    %64 = vmatpush2.msra.mxu0 0.0
    %65 = vmatprep.subr.mxu0 0.0
    %66 = vmatpush2.msra.mxu0 0.0
    %67 = vmatprep.subr.mxu0 0.0
    %68 = vmatpush2.msra.mxu0 0.0
    %69 = vmatprep.subr.mxu0 0.0
    %70 = vmatpush2.msra.mxu0 0.0
    %71 = vmatprep.subr.mxu0 0.0
    %72 = vmatpush2.msra.mxu0 0.0
    %73 = vmatprep.subr.mxu0 0.0
    %74 = vmatpush2.msra.mxu0 0.0
    %75 = vmatprep.subr.mxu0 0.0
    %76 = vmatpush2.msra.mxu0 0.0
    %77 = vmatprep.subr.mxu0 0.0
    %78 = vmatpush2.msra.mxu0 0.0
    %79 = vmatprep.subr.mxu0 0.0
    %80 = vmatpush2.msra.mxu0 0.0
    %81 = vmatprep.subr.mxu0 0.0
    %82 = vmatpush2.msra.mxu0 0.0
    %83 = vmatprep.subr.mxu0 0.0
    %84 = vmatpush2.msra.mxu0 0.0
    %85 = vmatprep.subr.mxu0 0.0
    %86 = vmatpush2.msra.mxu0 0.0
    %87 = vmatprep.subr.mxu0 0.0
    %88 = vmatpush2.msra.mxu0 0.0
    %89 = vmatprep.subr.mxu0 0.0
    %90 = vmatpush2.msra.mxu0 0.0
    %91 = vmatprep.subr.mxu0 0.0
    %92 = vmatpush2.msra.mxu0 0.0
    %93 = vmatprep.mubr.f32.mxu0 0.0
    %94 = vmatmul.mubr.f32.gmra.mxu0 %v20
    %v95 = vpop.f32.mrf.mxu0
    %v96 = vadd.f32 0.0, %v95
    %v97 = vpop.f32.mrf.mxu0
    %98 = vmatprep.mubr.f32.mxu0 0.0
    %99 = vmatmul.mubr.f32.gmra.mxu0 %v23
    %v100 = vpop.f32.mrf.mxu0
    %v101 = vadd.f32 0.0, %v100
    %v102 = vpop.f32.mrf.mxu0
    %103 = vdwg.mxu0
    %v104 = vadd.f32 %v96, %v96
    %v105 = vadd.f32 %v101, %v101
    %v106 = vmul.f32 %v104, %v104
    %v107 = vmul.f32 %v105, %v105
    %108 = vadd.xlane.f32.xlu0 %v106
    %v109 = vpop.xlane.xlu0 %108
    %110 = vadd.xlane.f32.xlu0 %v107
    %v111 = vpop.xlane.xlu0 %110
    %v112 = vrsqrt.pop %v109
    %v113 = vmul.f32 %v109, %v112
    %vm114 = vcmp.eq.f32.partialorder %v109, inf
    %v115 = vsel %vm114, %v109, %v113
    %vm116 = vcmp.eq.f32.partialorder %v109, 0.0
    %v117 = vand.u32 %v109, 2147483648
    %v118 = vsel %vm116, %v117, %v115
    %v119 = vrsqrt.pop %v111
    %v120 = vmul.f32 %v111, %v119
    %vm121 = vcmp.eq.f32.partialorder %v111, inf
    %v122 = vsel %vm121, %v111, %v120
    %vm123 = vcmp.eq.f32.partialorder %v111, 0.0
    %v124 = vand.u32 %v111, 2147483648
    %v125 = vsel %vm123, %v124, %v122
    %v126 = vmax.f32 %v118, 1e-12
    %v127 = vmax.f32 %v125, 1e-12
    %v128 = vrcp.pop %v126
    %v129 = vmul.f32 %v104, %v128
    %v130 = vrcp.pop %v127
    %v131 = vmul.f32 %v105, %v130
    %v132 = vld [vmem:[%s2] sm:$0xff]
    %v133 = vld [vmem:[%s2 + $0x8] sm:$0xff]
    %v134 = vadd.f32 %v132, %v129
    %v135 = vadd.f32 %v133, %v131
    %136 = vst [vmem:[#allocation2] sm:$0xff] %v134
    %137 = vst [vmem:[#allocation2 + $0x8] sm:$0xff] %v135
    // Predicated region
    $region14: #{graph_conv_forward.10} parent=1 // pred_check
      _
    $region15: #{graph_conv_forward.10} parent=1 // pred_check_branch
      %139 = sbr.rel (0) target = $region17
    $region16: #{graph_conv_forward.10} parent=1 // pred_region
      %s141 = ssub.s32 256, 256
      %142 = vsyncadd [#allocation3], %s141
      %s143 = sshll.u32 [#allocation2], 4
      %s144 = int_to_ptr.vmem [resolvable:$true] %s143
      %149 = dma.vmem_to_hbm [thread:$0]  %s144, 256, %s3, [#allocation3], 128, 128, 8
    $region17: #{graph_conv_forward.10} parent=1 // pred_fallthru
      _
    // Predicated region
    $region18: #{graph_conv_forward.10} parent=1 // pred_check
      _
    $region19: #{graph_conv_forward.10} parent=1 // pred_check_branch
      %151 = sbr.rel (0) target = $region21
    $region20: #{graph_conv_forward.10} parent=1 // pred_region
      %152 = dma.done [#allocation3], 256
    $region21: #{graph_conv_forward.10} parent=1 // pred_fallthru
      _
    %153 = vsyncpa [#allocation3], 1

</llo_original>
